<compile_context>
chip_gen: v7x
topology: tpu7x:2x2x1
jax: 0.10.0
libtpu: 0.0.40
codegen_flags: <defaults>
</compile_context>

<pallas_src>
import functools

import jax
import jax.numpy as jnp
from jax.experimental import pallas as pl
from jax.experimental.pallas import tpu as pltpu


def _round_up(n, m):
    return ((n + m - 1) // m) * m


def _round_down(n, m):
    return (n // m) * m


def relax_critic_kernel(x_ref, w1_ref, b1_ref, w2_ref, o_ref, *, hidden_chunk):
    """One batch tile: out = relu(x @ w1 + b1) @ w2   (b2 added in the wrapper).

    x_ref : (TB, dim)         bf16 (streamed)
    w1_ref: (dim, hidden_pad) bf16 (resident)
    b1_ref: (1, hidden_pad)   f32  (resident)
    w2_ref: (1, hidden_pad)   f32  (resident)
    o_ref : (TB, 1)           f32
    """
    x = x_ref[...]                              # load the tile once
    hidden_pad = w1_ref.shape[1]
    n_chunks = hidden_pad // hidden_chunk       # exact by construction (wrapper pads)

    acc = jnp.zeros((x.shape[0], 1), jnp.float32)
    # Static unroll over hidden chunks: bounds the (TB, chunk) f32 intermediate;
    # only the small (TB, 1) accumulator is carried between chunks.
    for c in range(n_chunks):
        lo = c * hidden_chunk
        hi = lo + hidden_chunk
        h = jnp.dot(x, w1_ref[:, lo:hi], preferred_element_type=jnp.float32)
        h = jnp.maximum(h + b1_ref[:, lo:hi], 0.0)          # f32 bias + ReLU (VPU)
        # hidden -> 1 projection on VPU + XLU lane-reduce (avoids an N=1 MXU matmul).
        acc = acc + jnp.sum(h * w2_ref[:, lo:hi], axis=-1, keepdims=True)
    o_ref[...] = acc.astype(o_ref.dtype)


def relax_critic_forward(x, w1, b1, w2, b2, *, tb=None,
                         compute_dtype=jnp.bfloat16):
    """RELAXCritic forward.  w1: (dim, hidden); b1: (hidden,)/(1,hidden);
    w2: (hidden,)/(hidden,1)/(1,hidden); b2: scalar-ish.  Returns (B, 1) f32."""
    assert x.ndim == 2
    B, dim = x.shape
    hidden = w1.shape[1]
    x_elt = jnp.dtype(compute_dtype).itemsize

    # ----- generation-aware sizing -----------------------------------------
    vmem_cap = 64 * 1024 * 1024          # conservative default = v7x per-TC VMEM
    try:
        vmem_cap = int(pltpu.get_tpu_info().vmem_capacity_bytes)
    except Exception:
        pass
    small_vmem = vmem_cap <= 64 * 1024 * 1024        # v7x-like
    # HBM bytes of x per grid step needed to hide ~0.35us/step overhead:
    # ~4 MiB on v5e/v6e (0.8-1.4 TB/s), ~9 MiB on v7x (3.2 TB/s).
    target_step_bytes = (9 if small_vmem else 4) * 1024 * 1024
    max_intermediate = 2 * 1024 * 1024   # cap on the (TB, chunk) f32 h tile

    lane_dim = _round_up(dim, 128)
    lane_hidden = _round_up(hidden, 128)

    if tb is None:
        tb_target = target_step_bytes // max(1, dim * x_elt)
        # Lane-padded VMEM budget: resident weights (default double-buffered) +
        # per-row cost of the double-buffered x and out tiles.
        resident = (_round_up(dim, 16) * lane_hidden * x_elt * 2     # w1
                    + 2 * 8 * lane_hidden * 4 * 2)                   # b1, w2
        per_row = 2 * lane_dim * x_elt + 2 * 128 * 4                 # x + (TB,1) out
        budget = (vmem_cap * 7) // 10 - resident - max_intermediate - 4 * 1024 * 1024
        tb_vmem = max(16, budget // per_row) if budget > 0 else 16
        tb = min(tb_target, tb_vmem)

    tb = int(max(16, min(tb, _round_up(B, 16))))
    tb = _round_up(tb, 16)               # sublane-safe for bf16 packing
    b_pad = _round_up(B, tb)

    # ----- hidden chunking ---------------------------------------------------
    if hidden <= 128 or tb * hidden * 4 <= max_intermediate:
        hchunk = hidden
        hidden_pad = hidden
    else:
        hchunk = max(128, _round_down(max_intermediate // (tb * 4), 128))
        hchunk = min(hchunk, hidden)
        hidden_pad = _round_up(hidden, hchunk)

    # ----- operand prep ------------------------------------------------------
    xc = x.astype(compute_dtype)
    w1c = w1.astype(compute_dtype)
    b1_row = jnp.asarray(b1, jnp.float32).reshape(1, hidden)
    w2_row = jnp.asarray(w2, jnp.float32).reshape(1, hidden)
    if b_pad != B:
        xc = jnp.pad(xc, ((0, b_pad - B), (0, 0)))
    if hidden_pad != hidden:
        # Zero-padded w2 columns contribute nothing, so padding w1/b1 is safe too.
        w1c = jnp.pad(w1c, ((0, 0), (0, hidden_pad - hidden)))
        b1_row = jnp.pad(b1_row, ((0, 0), (0, hidden_pad - hidden)))
        w2_row = jnp.pad(w2_row, ((0, 0), (0, hidden_pad - hidden)))

    grid = (b_pad // tb,)

    # ----- explicit scoped-VMEM budget (lane-padded bytes) -------------------
    lane_hpad = _round_up(hidden_pad, 128)
    vmem_need = (2 * tb * lane_dim * x_elt                 # x, double-buffered
                 + 2 * tb * 128 * 4                        # (TB,1) out, lane-padded, x2
                 + 2 * _round_up(dim, 16) * lane_hpad * x_elt   # w1 (double-buffered)
                 + 2 * 2 * 8 * lane_hpad * 4               # b1, w2 rows
                 + tb * _round_up(hchunk, 128) * 4)        # f32 h chunk
    vmem_limit = min(max(vmem_need + 8 * 1024 * 1024, 32 * 1024 * 1024),
                     (vmem_cap * 9) // 10)

    flops = 2 * b_pad * dim * hidden_pad + 4 * b_pad * hidden_pad
    bytes_accessed = (b_pad * dim * x_elt + dim * hidden_pad * x_elt
                      + 2 * hidden_pad * 4 + b_pad * 4)

    kernel = functools.partial(relax_critic_kernel, hidden_chunk=hchunk)
    out = pl.pallas_call(
        kernel,
        out_shape=jax.ShapeDtypeStruct((b_pad, 1), jnp.float32),
        grid=grid,
        in_specs=[
            pl.BlockSpec((tb, dim), lambda i: (i, 0)),            # x: streamed
            pl.BlockSpec((dim, hidden_pad), lambda i: (0, 0)),    # w1: resident
            pl.BlockSpec((1, hidden_pad), lambda i: (0, 0)),      # b1: resident
            pl.BlockSpec((1, hidden_pad), lambda i: (0, 0)),      # w2 row: resident
        ],
        out_specs=pl.BlockSpec((tb, 1), lambda i: (i, 0)),
        compiler_params=pltpu.CompilerParams(
            dimension_semantics=("parallel",),
            vmem_limit_bytes=int(vmem_limit)),
        cost_estimate=pl.CostEstimate(
            flops=flops, transcendentals=0, bytes_accessed=bytes_accessed),
    )(xc, w1c, b1_row, w2_row)

    # b2 fused into the cheap post-kernel slice instead of a per-step SMEM load.
    b2_s = jnp.asarray(b2, jnp.float32).reshape(())
    return out[:B] + b2_s


def init_params(key, dim, hidden_dim):
    """Deterministic init mirroring PyTorch Linear defaults (uniform +-1/sqrt(fan_in))."""
    k1, k2, k3, k4 = jax.random.split(key, 4)
    bound1 = 1.0 / jnp.sqrt(dim)
    bound2 = 1.0 / jnp.sqrt(hidden_dim)
    # Stored transposed relative to PyTorch's (out, in) layout.
    w1 = jax.random.uniform(k1, (dim, hidden_dim), jnp.float32, -bound1, bound1)
    b1 = jax.random.uniform(k2, (hidden_dim,), jnp.float32, -bound1, bound1)
    w2 = jax.random.uniform(k3, (hidden_dim,), jnp.float32, -bound2, bound2)
    b2 = jax.random.uniform(k4, (), jnp.float32, -bound2, bound2)
    return w1, b1, w2, b2


def reference_forward(x, w1, b1, w2, b2, compute_dtype=jnp.bfloat16):
    """Reference with the same operand quantization as the kernel
    (bf16 x/w1, f32 accumulation / bias / ReLU / w2 reduction)."""
    xc = x.astype(compute_dtype).astype(jnp.float32)
    w1c = w1.astype(compute_dtype).astype(jnp.float32)
    h = jnp.maximum(
        jnp.dot(xc, w1c, precision=jax.lax.Precision.HIGHEST)
        + jnp.reshape(b1, (1, -1)), 0.0)
    return (jnp.dot(h, jnp.reshape(w2, (-1, 1)),
                    precision=jax.lax.Precision.HIGHEST)
            + jnp.reshape(jnp.asarray(b2, jnp.float32), ()))


if __name__ == "__main__":
    dim, hidden_dim, batch = 32, 32, 8

    key = jax.random.PRNGKey(0)
    kx, kp = jax.random.split(key)
    x = jax.random.normal(kx, (batch, dim), jnp.float32)
    w1, b1, w2, b2 = init_params(kp, dim, hidden_dim)

    out = jax.block_until_ready(relax_critic_forward(x, w1, b1, w2, b2))
    ref = reference_forward(x, w1, b1, w2, b2)
    assert out.shape == (batch, 1)
    assert jnp.allclose(out, ref, atol=2e-3, rtol=2e-3), \
        float(jnp.max(jnp.abs(out - ref)))

    # Second run: ragged batch exercising the padding path + multi-step grid.
    batch2 = 300
    x2 = jax.random.normal(jax.random.PRNGKey(1), (batch2, dim), jnp.float32)
    out2 = jax.block_until_ready(relax_critic_forward(x2, w1, b1, w2, b2, tb=128))
    ref2 = reference_forward(x2, w1, b1, w2, b2)
    assert out2.shape == (batch2, 1)
    assert jnp.allclose(out2, ref2, atol=2e-3, rtol=2e-3), \
        float(jnp.max(jnp.abs(out2 - ref2)))

    print("KERNEL_OK")
</pallas_src>

<mosaic_0001>
module attributes {stable_mosaic.version = 11 : i64} {
  func.func @relax_critic_kernel(%arg0: i32, %arg1: memref<16x32xbf16, #tpu.memory_space<vmem>>, %arg2: memref<32x32xbf16, #tpu.memory_space<vmem>>, %arg3: memref<1x32xf32, #tpu.memory_space<vmem>>, %arg4: memref<1x32xf32, #tpu.memory_space<vmem>>, %arg5: memref<16x1xf32, #tpu.memory_space<vmem>>) attributes {dimension_semantics = [#tpu.dimension_semantics<parallel>], iteration_bounds = array<i64: 1>, scalar_prefetch = 0 : i64, scratch_operands = 0 : i64, tpu.core_type = #tpu.core_type<tc>, window_params = [{transform_indices = @transform_0, window_bounds = array<i64: 16, 32>}, {pipeline_mode = #tpu.pipeline_mode<synchronous>, transform_indices = @transform_1, window_bounds = array<i64: 32, 32>}, {pipeline_mode = #tpu.pipeline_mode<synchronous>, transform_indices = @transform_2, window_bounds = array<i64: 1, 32>}, {pipeline_mode = #tpu.pipeline_mode<synchronous>, transform_indices = @transform_3, window_bounds = array<i64: 1, 32>}, {transform_indices = @transform_4, window_bounds = array<i64: 16, 1>}]} {
    %c0 = arith.constant 0 : index
    %c0_0 = arith.constant 0 : index
    %0 = vector.load %arg1[%c0, %c0_0] : memref<16x32xbf16, #tpu.memory_space<vmem>>, vector<16x32xbf16>
    %cst = arith.constant 0.000000e+00 : f32
    %1 = vector.broadcast %cst : f32 to vector<16x1xf32>
    %c0_1 = arith.constant 0 : index
    %c0_2 = arith.constant 0 : index
    %2 = vector.load %arg2[%c0_1, %c0_2] : memref<32x32xbf16, #tpu.memory_space<vmem>>, vector<32x32xbf16>
    %cst_3 = arith.constant dense<0.000000e+00> : vector<16x32xf32>
    %3 = tpu.matmul %0, %2, %cst_3 {dimension_numbers = #tpu.dot_dimension_numbers<[1], [0], [0], [1], [0, 0, 1, 1], [], []>} : vector<16x32xbf16>, vector<32x32xbf16>, vector<16x32xf32> -> vector<16x32xf32>
    %c0_4 = arith.constant 0 : index
    %c0_5 = arith.constant 0 : index
    %4 = vector.load %arg3[%c0_4, %c0_5] : memref<1x32xf32, #tpu.memory_space<vmem>>, vector<1x32xf32>
    %5 = vector.broadcast %4 : vector<1x32xf32> to vector<16x32xf32>
    %6 = arith.addf %3, %5 : vector<16x32xf32>
    %cst_6 = arith.constant 0.000000e+00 : f32
    %7 = vector.broadcast %cst_6 : f32 to vector<16x32xf32>
    %8 = arith.maximumf %6, %7 : vector<16x32xf32>
    %c0_7 = arith.constant 0 : index
    %c0_8 = arith.constant 0 : index
    %9 = vector.load %arg4[%c0_7, %c0_8] : memref<1x32xf32, #tpu.memory_space<vmem>>, vector<1x32xf32>
    %10 = vector.broadcast %9 : vector<1x32xf32> to vector<16x32xf32>
    %11 = arith.mulf %8, %10 : vector<16x32xf32>
    %cst_9 = arith.constant dense<0.000000e+00> : vector<16xf32>
    %12 = vector.multi_reduction <add>, %11, %cst_9 [1] : vector<16x32xf32> to vector<16xf32>
    %13 = vector.shape_cast %12 : vector<16xf32> to vector<16x1xf32>
    %14 = arith.addf %1, %13 : vector<16x1xf32>
    %c0_10 = arith.constant 0 : index
    %c0_11 = arith.constant 0 : index
    %15 = vector.load %arg5[%c0_10, %c0_11] : memref<16x1xf32, #tpu.memory_space<vmem>>, vector<16x1xf32>
    tpu.vector_store %arg5[%c0_10, %c0_11], %14 {strides = array<i32>} : memref<16x1xf32, #tpu.memory_space<vmem>>, vector<16x1xf32>,
    return
  }
  func.func @transform_0(%arg0: i32) -> (i32, i32) {
    %c0_i32 = arith.constant 0 : i32
    %c0_i32_0 = arith.constant 0 : i32
    return %arg0, %c0_i32 : i32, i32
  }
  func.func @transform_1(%arg0: i32) -> (i32, i32) {
    %c0_i32 = arith.constant 0 : i32
    %c0_i32_0 = arith.constant 0 : i32
    %c0_i32_1 = arith.constant 0 : i32
    return %c0_i32, %c0_i32_0 : i32, i32
  }
  func.func @transform_2(%arg0: i32) -> (i32, i32) {
    %c0_i32 = arith.constant 0 : i32
    %c0_i32_0 = arith.constant 0 : i32
    %c0_i32_1 = arith.constant 0 : i32
    return %c0_i32, %c0_i32_0 : i32, i32
  }
  func.func @transform_3(%arg0: i32) -> (i32, i32) {
    %c0_i32 = arith.constant 0 : i32
    %c0_i32_0 = arith.constant 0 : i32
    %c0_i32_1 = arith.constant 0 : i32
    return %c0_i32, %c0_i32_0 : i32, i32
  }
  func.func @transform_4(%arg0: i32) -> (i32, i32) {
    %c0_i32 = arith.constant 0 : i32
    %c0_i32_0 = arith.constant 0 : i32
    return %arg0, %c0_i32 : i32, i32
  }
}

</mosaic_0001>

<llo_original>
// kernel: tpu_custom_call.1
$region0: #{tpu_custom_call.1}
  #allocation0 [shape = 'u32[]', space=smem, size = 0x4, offset = 0x4, fixed_abs, tag = 'smem constant byte address 0x4 - core index']
  #allocation1 [shape = 'u32[144,128]{1,0:T(1,128)}', space=vmem, size = 0x12000, scoped, tag = 'internal scratch']
  %s0 = inlined_call_operand.hbm [shape: bf16[16,32], index: 0, kind: input, shape index: {}]
  %s1 = inlined_call_operand.hbm [shape: bf16[32,32], index: 1, kind: input, shape index: {}]
  %s2 = inlined_call_operand.vmem [shape: f32[1,32], index: 2, kind: input, shape index: {}]
  %s3 = inlined_call_operand.vmem [shape: f32[1,32], index: 3, kind: input, shape index: {}]
  %s4 = inlined_call_operand.vmem [shape: f32[16,1], index: 4, kind: output, shape index: {}]
  %s5 = sld [smem:[#allocation0]]
  $region34: #{tpu_custom_call.1} parent=0
    _
  %s7 = ssub.s32 1, %s5
  %s8 = scalar_select 0, %s7, %s5
  $region1: #{tpu_custom_call.1} parent=0
    #allocation2 [shape = 'u8[4096]{0}', space=vmem, size = 0x1000, scoped, tag = 'input window, operand 0, single buffered']
    #allocation3 [shape = 's32[1]{0}', space=sflag, size = 0x4, scoped, tag = 'scoped memory for tpu_custom_call.1']
    #allocation4 [shape = 'u8[8192]{0}', space=vmem, size = 0x2000, scoped, tag = 'input window, operand 1, single buffered']
    #allocation5 [shape = 's32[1]{0}', space=sflag, size = 0x4, scoped, tag = 'scoped memory for tpu_custom_call.1']
    %9 = vsyncpa [#allocation3], 0
    %10 = vsyncpa [#allocation5], 0
    // Predicated region
    $region2: #{tpu_custom_call.1} parent=1 // pred_check
      _
    $region3: #{tpu_custom_call.1} parent=1 // pred_check_branch
      %12 = sbr.rel (0) target = $region5
    $region4: #{tpu_custom_call.1} parent=1 // pred_region
      %s14 = ssub.s32 128, 128
      %15 = vsyncadd [#allocation3], %s14
      %s16 = sshll.u32 [#allocation2], 4
      %s17 = int_to_ptr.vmem [resolvable:$true] %s16
      %22 = dma.hbm_to_vmem [thread:$0]  %s0, 128, %s17, [#allocation3], 64, 64, 4
    $region5: #{tpu_custom_call.1} parent=1 // pred_fallthru
      _
    // Predicated region
    $region6: #{tpu_custom_call.1} parent=1 // pred_check
      _
    $region7: #{tpu_custom_call.1} parent=1 // pred_check_branch
      %24 = sbr.rel (0) target = $region9
    $region8: #{tpu_custom_call.1} parent=1 // pred_region
      %s26 = ssub.s32 256, 256
      %27 = vsyncadd [#allocation5], %s26
      %s28 = sshll.u32 [#allocation4], 4
      %s29 = int_to_ptr.vmem [resolvable:$true] %s28
      %34 = dma.hbm_to_vmem [thread:$0]  %s1, 256, %s29, [#allocation5], 64, 64, 4
    $region9: #{tpu_custom_call.1} parent=1 // pred_fallthru
      _
    // Predicated region
    $region10: #{tpu_custom_call.1} parent=1 // pred_check
      _
    $region11: #{tpu_custom_call.1} parent=1 // pred_check_branch
      %36 = sbr.rel (0) target = $region13
    $region12: #{tpu_custom_call.1} parent=1 // pred_region
      _
    $region13: #{tpu_custom_call.1} parent=1 // pred_fallthru
      _
    // Predicated region
    $region14: #{tpu_custom_call.1} parent=1 // pred_check
      _
    $region15: #{tpu_custom_call.1} parent=1 // pred_check_branch
      %38 = sbr.rel (0) target = $region17
    $region16: #{tpu_custom_call.1} parent=1 // pred_region
      _
    $region17: #{tpu_custom_call.1} parent=1 // pred_fallthru
      _
    // Predicated region
    $region18: #{tpu_custom_call.1} parent=1 // pred_check
      _
    $region19: #{tpu_custom_call.1} parent=1 // pred_check_branch
      %40 = sbr.rel (0) target = $region21
    $region20: #{tpu_custom_call.1} parent=1 // pred_region
      %41 = dma.done [#allocation3], 128
    $region21: #{tpu_custom_call.1} parent=1 // pred_fallthru
      _
    // Predicated region
    $region22: #{tpu_custom_call.1} parent=1 // pred_check
      _
    $region23: #{tpu_custom_call.1} parent=1 // pred_check_branch
      %43 = sbr.rel (0) target = $region25
    $region24: #{tpu_custom_call.1} parent=1 // pred_region
      %44 = dma.done [#allocation5], 256
    $region25: #{tpu_custom_call.1} parent=1 // pred_fallthru
      _
    %v46 = vld [vmem:[#allocation2] sm:$0xf]
    %v47 = vld [vmem:[#allocation2 + $0x4] sm:$0xf]
    %v48 = vld [vmem:[#allocation4] sm:$0xf]
    %v49 = vld [vmem:[#allocation4 + $0x4] sm:$0xf]
    %v50 = vld [vmem:[#allocation4 + $0x8] sm:$0xf]
    %v51 = vld [vmem:[#allocation4 + $0xc] sm:$0xf]
    %v52 = vld [vmem:[%s2] sm:$0x1]
    %v54 = vlaneseq
    %v55 = vshrl.u32 %v54, 7
    %v56 = vsub.s32 0, %v55
    %v57 = vrot.slane %v52, %v56
    %v61 = vunpack.c.l.b16 %v46
    %v62 = vunpack.c.l.b16 %v47
    %v63 = vpack.c.b16 %v62, %v61
    %v68 = vunpack.c.l.b16 %v48
    %v69 = vunpack.c.l.b16 %v49
    %v70 = vunpack.c.l.b16 %v50
    %v71 = vunpack.c.l.b16 %v51
    %v72 = vpack.c.b16 %v69, %v68
    %v73 = vpack.c.b16 %v71, %v70
    %vm76 = vcmask 261120
    %v78 = vsel %vm76, %v63, 0
    %80 = vmatprep.subr.bf16.mxu0 0
    %81 = vmatpush1.bf16.msra.mxu0 %v72
    %82 = vmatprep.subr.bf16.mxu0 0
    %83 = vmatpush1.bf16.msra.mxu0 %v73
    %84 = vmatprep.subr.bf16.mxu0 0
    %85 = vmatpush1.bf16.msra.mxu0 0
    %86 = vmatprep.subr.bf16.mxu0 0
    %87 = vmatpush1.bf16.msra.mxu0 0
    %88 = vmatprep.subr.bf16.mxu0 0
    %89 = vmatpush1.bf16.msra.mxu0 0
    %90 = vmatprep.subr.bf16.mxu0 0
    %91 = vmatpush1.bf16.msra.mxu0 0
    %92 = vmatprep.subr.bf16.mxu0 0
    %93 = vmatpush1.bf16.msra.mxu0 0
    %94 = vmatprep.subr.bf16.mxu0 0
    %95 = vmatpush1.bf16.msra.mxu0 0
    %96 = vmatprep.subr.bf16.mxu0 0
    %97 = vmatpush1.bf16.msra.mxu0 0
    %98 = vmatprep.subr.bf16.mxu0 0
    %99 = vmatpush1.bf16.msra.mxu0 0
    %100 = vmatprep.subr.bf16.mxu0 0
    %101 = vmatpush1.bf16.msra.mxu0 0
    %102 = vmatprep.subr.bf16.mxu0 0
    %103 = vmatpush1.bf16.msra.mxu0 0
    %104 = vmatprep.subr.bf16.mxu0 0
    %105 = vmatpush1.bf16.msra.mxu0 0
    %106 = vmatprep.subr.bf16.mxu0 0
    %107 = vmatpush1.bf16.msra.mxu0 0
    %108 = vmatprep.subr.bf16.mxu0 0
    %109 = vmatpush1.bf16.msra.mxu0 0
    %110 = vmatprep.subr.bf16.mxu0 0
    %111 = vmatpush1.bf16.msra.mxu0 0
    %112 = vmatprep.mubr.bf16.mxu0 0
    %113 = vmatmul.mubr.bf16.gmra.mrb[0].mxu0 %v78
    %v114 = vpop.f32.mrb[0].mxu0
    %v115 = vadd.f32 %v57, %v114
    %v116 = vpop.f32.mrb[0].mxu0
    %v117 = vpop.f32.mrb[0].mxu0
    %v118 = vadd.f32 %v57, %v117
    %v119 = vpop.f32.mrb[0].mxu0
    %120 = vdwg.mxu0
    %v121 = vmax.f32 %v115, 0.0
    %v122 = vmax.f32 %v118, 0.0
    %v123 = vld [vmem:[%s3] sm:$0x1]
    %v125 = vlaneseq
    %v126 = vshrl.u32 %v125, 7
    %v127 = vsub.s32 0, %v126
    %v128 = vrot.slane %v123, %v127
    %v130 = vmul.f32 %v121, %v128
    %v131 = vmul.f32 %v122, %v128
    %v132 = vsel %vm76, %v130, 0.0
    %133 = vadd.xlane.f32.xlu0 %v132
    %v134 = vpop.xlane.xlu0 %133
    %v135 = vsel %vm76, %v131, 0.0
    %136 = vadd.xlane.f32.xlu0 %v135
    %v137 = vpop.xlane.xlu0 %136
    %v138 = vadd.f32 %v134, 0.0
    %v139 = vadd.f32 %v137, 0.0
    %vm140 = vcmask 7168
    %141 = vst.msk [vmem:[%s4] sm:$0xff] %vm140, %v138
    %142 = vst.msk [vmem:[%s4 + $0x8] sm:$0xff] %vm140, %v139
    // Predicated region
    $region26: #{tpu_custom_call.1} parent=1 // pred_check
      _
    $region27: #{tpu_custom_call.1} parent=1 // pred_check_branch
      %144 = sbr.rel (0) target = $region29
    $region28: #{tpu_custom_call.1} parent=1 // pred_region
      _
    $region29: #{tpu_custom_call.1} parent=1 // pred_fallthru
      _
    // Predicated region
    $region30: #{tpu_custom_call.1} parent=1 // pred_check
      _
    $region31: #{tpu_custom_call.1} parent=1 // pred_check_branch
      %146 = sbr.rel (0) target = $region33
    $region32: #{tpu_custom_call.1} parent=1 // pred_region
      _
    $region33: #{tpu_custom_call.1} parent=1 // pred_fallthru
      _
    %147 = vsyncpa [#allocation3], 1
    %148 = vsyncpa [#allocation5], 1

</llo_original>
